<compile_context>
chip_gen: v7x
topology: tpu7x:2x2x1
jax: 0.10.0
libtpu: 0.0.40
codegen_flags: <defaults>
</compile_context>

<pallas_src>
import math
import functools

import jax
import jax.numpy as jnp
from jax import lax
from jax.experimental import pallas as pl
from jax.experimental.pallas import tpu as pltpu


def _attention_kernel(x_ref, w_ref, b_ref, o_ref, *, n_head: int):
    # x_ref : (T, C)   w_ref : (C, 3C)   b_ref : (1, 3C)   o_ref : (T, C)
    x = x_ref[...]                                        # (T, C) f32
    T, C = x.shape
    D = C // n_head
    inv_sqrt_d = jnp.float32(1.0 / math.sqrt(D))
    neg_big = jnp.float32(-1e30)

    # Fused QKV projection: bf16 operands on the MXU, f32 accumulation.
    qkv = jnp.dot(x.astype(jnp.bfloat16),
                  w_ref[...].astype(jnp.bfloat16),
                  preferred_element_type=jnp.float32) + b_ref[...]   # (T, 3C) f32

    # Fold the score scale into q once (T*C elements, not H*T*T scores).
    q_all = qkv[:, 0 * C:1 * C] * inv_sqrt_d              # (T, C) f32
    k_all = qkv[:, 1 * C:2 * C]
    v_all = qkv[:, 2 * C:3 * C]

    # Plain causal tril mask — batch is a grid axis, so no block-diagonal /
    # integer-divide trickery is needed.
    row = lax.broadcasted_iota(jnp.int32, (T, T), 0)
    col = lax.broadcasted_iota(jnp.int32, (T, T), 1)
    mask = col <= row                                     # (T, T) bool

    # Per-head attention: heads are static lane slices (no XLU transposes).
    outs = []
    for h in range(n_head):
        qh = q_all[:, h * D:(h + 1) * D].astype(jnp.bfloat16)   # (T, D)
        kh = k_all[:, h * D:(h + 1) * D].astype(jnp.bfloat16)
        vh = v_all[:, h * D:(h + 1) * D].astype(jnp.bfloat16)

        # q @ k^T without an explicit transpose (contract the D axis of both);
        # bf16 inputs, f32 accumulate.
        s = lax.dot_general(qh, kh, (((1,), (1,)), ((), ())),
                            preferred_element_type=jnp.float32)  # (T, T) f32
        s = jnp.where(mask, s, neg_big)

        # Numerically stable softmax, all f32 (v5e VPU/EUP have no bf16).
        m = jnp.max(s, axis=-1, keepdims=True)
        p = jnp.exp(s - m)
        denom = jnp.sum(p, axis=-1, keepdims=True)
        r = pl.reciprocal(denom, approx=True)             # EUP slot
        r = r * (2.0 - denom * r)                         # one Newton step (VALU)
        att = p * r

        outs.append(jnp.dot(att.astype(jnp.bfloat16), vh,
                            preferred_element_type=jnp.float32))  # (T, D) f32

    # Re-assemble heads into one lane-contiguous slab and store once.
    # (C=32 < 128 lanes here -> masked store; fine at toy size, keep the
    #  production output block a multiple of 128 lanes.)
    y = jnp.concatenate(outs, axis=-1)                    # (T, C)
    o_ref[...] = y.astype(o_ref.dtype)


def attention_pallas(x, w_qkv, b_qkv, n_head: int):
    """x: (B, T, C) float32; w_qkv: (C, 3C) (pre-transposed Linear weight);
    b_qkv: (3C,).  Returns (B, T, C)."""
    B, T, C = x.shape
    b2d = b_qkv.reshape(1, 3 * C)
    kernel = functools.partial(_attention_kernel, n_head=n_head)

    out = pl.pallas_call(
        kernel,
        out_shape=jax.ShapeDtypeStruct((B, T, C), x.dtype),
        grid_spec=pltpu.PrefetchScalarGridSpec(
            num_scalar_prefetch=0,
            grid=(B,),                          # one batch element per step
            in_specs=[
                pl.BlockSpec((None, T, C), lambda b: (b, 0, 0)),
                pl.BlockSpec((C, 3 * C), lambda b: (0, 0)),
                pl.BlockSpec((1, 3 * C), lambda b: (0, 0)),
            ],
            out_specs=pl.BlockSpec((None, T, C), lambda b: (b, 0, 0)),
        ),
        compiler_params=pltpu.CompilerParams(
            # Batch steps are independent -> shard across v7x's 2 TCs.
            dimension_semantics=("parallel",)),
    )(x, w_qkv, b2d)
    return out


def reference_attention(x, w_qkv, b_qkv, n_head: int):
    """Pure-JAX f32 reference mirroring the PyTorch forward."""
    B, T, C = x.shape
    D = C // n_head
    qkv = x @ w_qkv + b_qkv
    q, k, v = jnp.split(qkv, 3, axis=-1)
    q = q.reshape(B, T, n_head, D).transpose(0, 2, 1, 3)
    k = k.reshape(B, T, n_head, D).transpose(0, 2, 1, 3)
    v = v.reshape(B, T, n_head, D).transpose(0, 2, 1, 3)
    att = jnp.einsum("bhtd,bhsd->bhts", q, k) / math.sqrt(D)
    mask = jnp.tril(jnp.ones((T, T), dtype=bool))
    att = jnp.where(mask, att, -jnp.inf)
    att = jax.nn.softmax(att, axis=-1)
    y = jnp.einsum("bhts,bhsd->bhtd", att, v)
    return y.transpose(0, 2, 1, 3).reshape(B, T, C)


if __name__ == "__main__":
    # config: n_embd=32, n_head=4, n_layer=2  (synthetic, deterministic init)
    B, T, C = 2, 8, 32
    n_head = 4
    n_layer = 2

    key = jax.random.PRNGKey(0)
    kx, kw, kb = jax.random.split(key, 3)

    # nn.Linear(C, 3C): weight (3C, C) ~ U(-1/sqrt(C), 1/sqrt(C)), then
    # scaled by 1/sqrt(n_layer*2); bias (3C,) ~ U(-1/sqrt(C), 1/sqrt(C)).
    bound = 1.0 / math.sqrt(C)
    w_torch = jax.random.uniform(kw, (3 * C, C), jnp.float32, -bound, bound)
    w_torch = w_torch * (1.0 / math.sqrt(n_layer * 2))
    b_qkv = jax.random.uniform(kb, (3 * C,), jnp.float32, -bound, bound)
    w_qkv = w_torch.T  # (C, 3C) so the kernel computes x @ W + b

    x = jax.random.normal(kx, (B, T, C), jnp.float32)

    out = attention_pallas(x, w_qkv, b_qkv, n_head)
    out = jax.block_until_ready(out)

    ref = reference_attention(x, w_qkv, b_qkv, n_head)
    assert out.shape == (B, T, C)
    # Tolerance reflects bf16 MXU operands (f32 accumulate) vs. the f32
    # reference; the softmax reciprocal itself is Newton-refined.
    assert jnp.allclose(out, ref, atol=2e-2, rtol=2e-2), "mismatch vs reference"

    print("KERNEL_OK")
</pallas_src>

<mosaic_0001>
module attributes {stable_mosaic.version = 11 : i64} {
  func.func @_attention_kernel(%arg0: i32, %arg1: memref<1x8x32xf32, #tpu.memory_space<vmem>>, %arg2: memref<32x96xf32, #tpu.memory_space<vmem>>, %arg3: memref<1x96xf32, #tpu.memory_space<vmem>>, %arg4: memref<1x8x32xf32, #tpu.memory_space<vmem>>) attributes {dimension_semantics = [#tpu.dimension_semantics<parallel>], iteration_bounds = array<i64: 2>, scalar_prefetch = 0 : i64, scratch_operands = 0 : i64, tpu.core_type = #tpu.core_type<tc>, window_params = [{transform_indices = @transform_0, window_bounds = array<i64: 1, 8, 32>}, {pipeline_mode = #tpu.pipeline_mode<synchronous>, transform_indices = @transform_1, window_bounds = array<i64: 32, 96>}, {pipeline_mode = #tpu.pipeline_mode<synchronous>, transform_indices = @transform_2, window_bounds = array<i64: 1, 96>}, {transform_indices = @transform_3, window_bounds = array<i64: 1, 8, 32>}]} {
    %c0 = arith.constant 0 : index
    %c0_0 = arith.constant 0 : index
    %c0_1 = arith.constant 0 : index
    %0 = vector.load %arg1[%c0, %c0_0, %c0_1] : memref<1x8x32xf32, #tpu.memory_space<vmem>>, vector<1x8x32xf32>
    %1 = vector.shape_cast %0 : vector<1x8x32xf32> to vector<8x32xf32>
    %2 = arith.truncf %1 : vector<8x32xf32> to vector<8x32xbf16>
    %c0_2 = arith.constant 0 : index
    %c0_3 = arith.constant 0 : index
    %3 = vector.load %arg2[%c0_2, %c0_3] : memref<32x96xf32, #tpu.memory_space<vmem>>, vector<32x96xf32>
    %4 = arith.truncf %3 : vector<32x96xf32> to vector<32x96xbf16>
    %cst = arith.constant dense<0.000000e+00> : vector<8x96xf32>
    %5 = tpu.matmul %2, %4, %cst {dimension_numbers = #tpu.dot_dimension_numbers<[1], [0], [0], [1], [0, 0, 1, 1], [], []>} : vector<8x32xbf16>, vector<32x96xbf16>, vector<8x96xf32> -> vector<8x96xf32>
    %c0_4 = arith.constant 0 : index
    %c0_5 = arith.constant 0 : index
    %6 = vector.load %arg3[%c0_4, %c0_5] : memref<1x96xf32, #tpu.memory_space<vmem>>, vector<1x96xf32>
    %7 = vector.broadcast %6 : vector<1x96xf32> to vector<8x96xf32>
    %8 = arith.addf %5, %7 : vector<8x96xf32>
    %9 = vector.extract_strided_slice %8 {offsets = [0, 0], sizes = [8, 32], strides = [1, 1]} : vector<8x96xf32> to vector<8x32xf32>
    %cst_6 = arith.constant 0.353553385 : f32
    %10 = vector.broadcast %cst_6 : f32 to vector<8x32xf32>
    %11 = arith.mulf %9, %10 : vector<8x32xf32>
    %12 = vector.extract_strided_slice %8 {offsets = [0, 32], sizes = [8, 32], strides = [1, 1]} : vector<8x96xf32> to vector<8x32xf32>
    %13 = vector.extract_strided_slice %8 {offsets = [0, 64], sizes = [8, 32], strides = [1, 1]} : vector<8x96xf32> to vector<8x32xf32>
    %14 = tpu.iota {dimensions = array<i32: 0>} : vector<8x8xi32>
    %15 = tpu.iota {dimensions = array<i32: 1>} : vector<8x8xi32>
    %16 = arith.cmpi sle, %15, %14 : vector<8x8xi32>
    %17 = vector.extract_strided_slice %11 {offsets = [0, 0], sizes = [8, 8], strides = [1, 1]} : vector<8x32xf32> to vector<8x8xf32>
    %18 = arith.truncf %17 : vector<8x8xf32> to vector<8x8xbf16>
    %19 = vector.extract_strided_slice %12 {offsets = [0, 0], sizes = [8, 8], strides = [1, 1]} : vector<8x32xf32> to vector<8x8xf32>
    %20 = arith.truncf %19 : vector<8x8xf32> to vector<8x8xbf16>
    %21 = vector.extract_strided_slice %13 {offsets = [0, 0], sizes = [8, 8], strides = [1, 1]} : vector<8x32xf32> to vector<8x8xf32>
    %22 = arith.truncf %21 : vector<8x8xf32> to vector<8x8xbf16>
    %cst_7 = arith.constant dense<0.000000e+00> : vector<8x8xf32>
    %23 = tpu.matmul %18, %20, %cst_7 {dimension_numbers = #tpu.dot_dimension_numbers<[1], [1], [0], [0], [0, 0, 1, 0], [], []>} : vector<8x8xbf16>, vector<8x8xbf16>, vector<8x8xf32> -> vector<8x8xf32>
    %cst_8 = arith.constant -1.000000e+30 : f32
    %24 = vector.broadcast %cst_8 : f32 to vector<8x8xf32>
    %25 = arith.select %16, %23, %24 : vector<8x8xi1>, vector<8x8xf32>
    %cst_9 = arith.constant dense<0xFF800000> : vector<8xf32>
    %26 = vector.multi_reduction <maximumf>, %25, %cst_9 [1] : vector<8x8xf32> to vector<8xf32>
    %27 = vector.shape_cast %26 : vector<8xf32> to vector<8x1xf32>
    %28 = vector.broadcast %27 : vector<8x1xf32> to vector<8x8xf32>
    %29 = arith.subf %25, %28 : vector<8x8xf32>
    %30 = math.exp %29 : vector<8x8xf32>
    %cst_10 = arith.constant dense<0.000000e+00> : vector<8xf32>
    %31 = vector.multi_reduction <add>, %30, %cst_10 [1] : vector<8x8xf32> to vector<8xf32>
    %32 = vector.shape_cast %31 : vector<8xf32> to vector<8x1xf32>
    %33 = tpu.reciprocal %32 {approx = true} : vector<8x1xf32> -> vector<8x1xf32>
    %34 = arith.mulf %32, %33 : vector<8x1xf32>
    %cst_11 = arith.constant 2.000000e+00 : f32
    %35 = vector.broadcast %cst_11 : f32 to vector<8x1xf32>
    %36 = arith.subf %35, %34 : vector<8x1xf32>
    %37 = arith.mulf %33, %36 : vector<8x1xf32>
    %38 = vector.broadcast %37 : vector<8x1xf32> to vector<8x8xf32>
    %39 = arith.mulf %30, %38 : vector<8x8xf32>
    %40 = arith.truncf %39 : vector<8x8xf32> to vector<8x8xbf16>
    %cst_12 = arith.constant dense<0.000000e+00> : vector<8x8xf32>
    %41 = tpu.matmul %40, %22, %cst_12 {dimension_numbers = #tpu.dot_dimension_numbers<[1], [0], [0], [1], [0, 0, 1, 1], [], []>} : vector<8x8xbf16>, vector<8x8xbf16>, vector<8x8xf32> -> vector<8x8xf32>
    %42 = vector.extract_strided_slice %11 {offsets = [0, 8], sizes = [8, 8], strides = [1, 1]} : vector<8x32xf32> to vector<8x8xf32>
    %43 = arith.truncf %42 : vector<8x8xf32> to vector<8x8xbf16>
    %44 = vector.extract_strided_slice %12 {offsets = [0, 8], sizes = [8, 8], strides = [1, 1]} : vector<8x32xf32> to vector<8x8xf32>
    %45 = arith.truncf %44 : vector<8x8xf32> to vector<8x8xbf16>
    %46 = vector.extract_strided_slice %13 {offsets = [0, 8], sizes = [8, 8], strides = [1, 1]} : vector<8x32xf32> to vector<8x8xf32>
    %47 = arith.truncf %46 : vector<8x8xf32> to vector<8x8xbf16>
    %cst_13 = arith.constant dense<0.000000e+00> : vector<8x8xf32>
    %48 = tpu.matmul %43, %45, %cst_13 {dimension_numbers = #tpu.dot_dimension_numbers<[1], [1], [0], [0], [0, 0, 1, 0], [], []>} : vector<8x8xbf16>, vector<8x8xbf16>, vector<8x8xf32> -> vector<8x8xf32>
    %cst_14 = arith.constant -1.000000e+30 : f32
    %49 = vector.broadcast %cst_14 : f32 to vector<8x8xf32>
    %50 = arith.select %16, %48, %49 : vector<8x8xi1>, vector<8x8xf32>
    %cst_15 = arith.constant dense<0xFF800000> : vector<8xf32>
    %51 = vector.multi_reduction <maximumf>, %50, %cst_15 [1] : vector<8x8xf32> to vector<8xf32>
    %52 = vector.shape_cast %51 : vector<8xf32> to vector<8x1xf32>
    %53 = vector.broadcast %52 : vector<8x1xf32> to vector<8x8xf32>
    %54 = arith.subf %50, %53 : vector<8x8xf32>
    %55 = math.exp %54 : vector<8x8xf32>
    %cst_16 = arith.constant dense<0.000000e+00> : vector<8xf32>
    %56 = vector.multi_reduction <add>, %55, %cst_16 [1] : vector<8x8xf32> to vector<8xf32>
    %57 = vector.shape_cast %56 : vector<8xf32> to vector<8x1xf32>
    %58 = tpu.reciprocal %57 {approx = true} : vector<8x1xf32> -> vector<8x1xf32>
    %59 = arith.mulf %57, %58 : vector<8x1xf32>
    %cst_17 = arith.constant 2.000000e+00 : f32
    %60 = vector.broadcast %cst_17 : f32 to vector<8x1xf32>
    %61 = arith.subf %60, %59 : vector<8x1xf32>
    %62 = arith.mulf %58, %61 : vector<8x1xf32>
    %63 = vector.broadcast %62 : vector<8x1xf32> to vector<8x8xf32>
    %64 = arith.mulf %55, %63 : vector<8x8xf32>
    %65 = arith.truncf %64 : vector<8x8xf32> to vector<8x8xbf16>
    %cst_18 = arith.constant dense<0.000000e+00> : vector<8x8xf32>
    %66 = tpu.matmul %65, %47, %cst_18 {dimension_numbers = #tpu.dot_dimension_numbers<[1], [0], [0], [1], [0, 0, 1, 1], [], []>} : vector<8x8xbf16>, vector<8x8xbf16>, vector<8x8xf32> -> vector<8x8xf32>
    %67 = vector.extract_strided_slice %11 {offsets = [0, 16], sizes = [8, 8], strides = [1, 1]} : vector<8x32xf32> to vector<8x8xf32>
    %68 = arith.truncf %67 : vector<8x8xf32> to vector<8x8xbf16>
    %69 = vector.extract_strided_slice %12 {offsets = [0, 16], sizes = [8, 8], strides = [1, 1]} : vector<8x32xf32> to vector<8x8xf32>
    %70 = arith.truncf %69 : vector<8x8xf32> to vector<8x8xbf16>
    %71 = vector.extract_strided_slice %13 {offsets = [0, 16], sizes = [8, 8], strides = [1, 1]} : vector<8x32xf32> to vector<8x8xf32>
    %72 = arith.truncf %71 : vector<8x8xf32> to vector<8x8xbf16>
    %cst_19 = arith.constant dense<0.000000e+00> : vector<8x8xf32>
    %73 = tpu.matmul %68, %70, %cst_19 {dimension_numbers = #tpu.dot_dimension_numbers<[1], [1], [0], [0], [0, 0, 1, 0], [], []>} : vector<8x8xbf16>, vector<8x8xbf16>, vector<8x8xf32> -> vector<8x8xf32>
    %cst_20 = arith.constant -1.000000e+30 : f32
    %74 = vector.broadcast %cst_20 : f32 to vector<8x8xf32>
    %75 = arith.select %16, %73, %74 : vector<8x8xi1>, vector<8x8xf32>
    %cst_21 = arith.constant dense<0xFF800000> : vector<8xf32>
    %76 = vector.multi_reduction <maximumf>, %75, %cst_21 [1] : vector<8x8xf32> to vector<8xf32>
    %77 = vector.shape_cast %76 : vector<8xf32> to vector<8x1xf32>
    %78 = vector.broadcast %77 : vector<8x1xf32> to vector<8x8xf32>
    %79 = arith.subf %75, %78 : vector<8x8xf32>
    %80 = math.exp %79 : vector<8x8xf32>
    %cst_22 = arith.constant dense<0.000000e+00> : vector<8xf32>
    %81 = vector.multi_reduction <add>, %80, %cst_22 [1] : vector<8x8xf32> to vector<8xf32>
    %82 = vector.shape_cast %81 : vector<8xf32> to vector<8x1xf32>
    %83 = tpu.reciprocal %82 {approx = true} : vector<8x1xf32> -> vector<8x1xf32>
    %84 = arith.mulf %82, %83 : vector<8x1xf32>
    %cst_23 = arith.constant 2.000000e+00 : f32
    %85 = vector.broadcast %cst_23 : f32 to vector<8x1xf32>
    %86 = arith.subf %85, %84 : vector<8x1xf32>
    %87 = arith.mulf %83, %86 : vector<8x1xf32>
    %88 = vector.broadcast %87 : vector<8x1xf32> to vector<8x8xf32>
    %89 = arith.mulf %80, %88 : vector<8x8xf32>
    %90 = arith.truncf %89 : vector<8x8xf32> to vector<8x8xbf16>
    %cst_24 = arith.constant dense<0.000000e+00> : vector<8x8xf32>
    %91 = tpu.matmul %90, %72, %cst_24 {dimension_numbers = #tpu.dot_dimension_numbers<[1], [0], [0], [1], [0, 0, 1, 1], [], []>} : vector<8x8xbf16>, vector<8x8xbf16>, vector<8x8xf32> -> vector<8x8xf32>
    %92 = vector.extract_strided_slice %11 {offsets = [0, 24], sizes = [8, 8], strides = [1, 1]} : vector<8x32xf32> to vector<8x8xf32>
    %93 = arith.truncf %92 : vector<8x8xf32> to vector<8x8xbf16>
    %94 = vector.extract_strided_slice %12 {offsets = [0, 24], sizes = [8, 8], strides = [1, 1]} : vector<8x32xf32> to vector<8x8xf32>
    %95 = arith.truncf %94 : vector<8x8xf32> to vector<8x8xbf16>
    %96 = vector.extract_strided_slice %13 {offsets = [0, 24], sizes = [8, 8], strides = [1, 1]} : vector<8x32xf32> to vector<8x8xf32>
    %97 = arith.truncf %96 : vector<8x8xf32> to vector<8x8xbf16>
    %cst_25 = arith.constant dense<0.000000e+00> : vector<8x8xf32>
    %98 = tpu.matmul %93, %95, %cst_25 {dimension_numbers = #tpu.dot_dimension_numbers<[1], [1], [0], [0], [0, 0, 1, 0], [], []>} : vector<8x8xbf16>, vector<8x8xbf16>, vector<8x8xf32> -> vector<8x8xf32>
    %cst_26 = arith.constant -1.000000e+30 : f32
    %99 = vector.broadcast %cst_26 : f32 to vector<8x8xf32>
    %100 = arith.select %16, %98, %99 : vector<8x8xi1>, vector<8x8xf32>
    %cst_27 = arith.constant dense<0xFF800000> : vector<8xf32>
    %101 = vector.multi_reduction <maximumf>, %100, %cst_27 [1] : vector<8x8xf32> to vector<8xf32>
    %102 = vector.shape_cast %101 : vector<8xf32> to vector<8x1xf32>
    %103 = vector.broadcast %102 : vector<8x1xf32> to vector<8x8xf32>
    %104 = arith.subf %100, %103 : vector<8x8xf32>
    %105 = math.exp %104 : vector<8x8xf32>
    %cst_28 = arith.constant dense<0.000000e+00> : vector<8xf32>
    %106 = vector.multi_reduction <add>, %105, %cst_28 [1] : vector<8x8xf32> to vector<8xf32>
    %107 = vector.shape_cast %106 : vector<8xf32> to vector<8x1xf32>
    %108 = tpu.reciprocal %107 {approx = true} : vector<8x1xf32> -> vector<8x1xf32>
    %109 = arith.mulf %107, %108 : vector<8x1xf32>
    %cst_29 = arith.constant 2.000000e+00 : f32
    %110 = vector.broadcast %cst_29 : f32 to vector<8x1xf32>
    %111 = arith.subf %110, %109 : vector<8x1xf32>
    %112 = arith.mulf %108, %111 : vector<8x1xf32>
    %113 = vector.broadcast %112 : vector<8x1xf32> to vector<8x8xf32>
    %114 = arith.mulf %105, %113 : vector<8x8xf32>
    %115 = arith.truncf %114 : vector<8x8xf32> to vector<8x8xbf16>
    %cst_30 = arith.constant dense<0.000000e+00> : vector<8x8xf32>
    %116 = tpu.matmul %115, %97, %cst_30 {dimension_numbers = #tpu.dot_dimension_numbers<[1], [0], [0], [1], [0, 0, 1, 1], [], []>} : vector<8x8xbf16>, vector<8x8xbf16>, vector<8x8xf32> -> vector<8x8xf32>
    %117 = tpu.concatenate %41, %66, %91, %116 in 1 : vector<8x8xf32>, vector<8x8xf32>, vector<8x8xf32>, vector<8x8xf32> -> vector<8x32xf32>
    %c0_31 = arith.constant 0 : index
    %c0_32 = arith.constant 0 : index
    %c0_33 = arith.constant 0 : index
    %118 = vector.load %arg4[%c0_31, %c0_32, %c0_33] : memref<1x8x32xf32, #tpu.memory_space<vmem>>, vector<1x8x32xf32>
    %119 = vector.shape_cast %118 : vector<1x8x32xf32> to vector<8x32xf32>
    %120 = vector.shape_cast %117 : vector<8x32xf32> to vector<1x8x32xf32>
    tpu.vector_store %arg4[%c0_31, %c0_32, %c0_33], %120 {strides = array<i32>} : memref<1x8x32xf32, #tpu.memory_space<vmem>>, vector<1x8x32xf32>,
    return
  }
  func.func @transform_0(%arg0: i32) -> (i32, i32, i32) {
    %c0_i32 = arith.constant 0 : i32
    %c0_i32_0 = arith.constant 0 : i32
    %c0_i32_1 = arith.constant 0 : i32
    return %arg0, %c0_i32, %c0_i32_0 : i32, i32, i32
  }
  func.func @transform_1(%arg0: i32) -> (i32, i32) {
    %c0_i32 = arith.constant 0 : i32
    %c0_i32_0 = arith.constant 0 : i32
    %c0_i32_1 = arith.constant 0 : i32
    return %c0_i32, %c0_i32_0 : i32, i32
  }
  func.func @transform_2(%arg0: i32) -> (i32, i32) {
    %c0_i32 = arith.constant 0 : i32
    %c0_i32_0 = arith.constant 0 : i32
    %c0_i32_1 = arith.constant 0 : i32
    return %c0_i32, %c0_i32_0 : i32, i32
  }
  func.func @transform_3(%arg0: i32) -> (i32, i32, i32) {
    %c0_i32 = arith.constant 0 : i32
    %c0_i32_0 = arith.constant 0 : i32
    %c0_i32_1 = arith.constant 0 : i32
    return %arg0, %c0_i32, %c0_i32_0 : i32, i32, i32
  }
}

</mosaic_0001>

<llo_original>
// kernel: tpu_custom_call.1
$region0: #{tpu_custom_call.1}
  #allocation0 [shape = 'u32[]', space=smem, size = 0x4, offset = 0x4, fixed_abs, tag = 'smem constant byte address 0x4 - core index']
  #allocation1 [shape = 'u32[144,128]{1,0:T(1,128)}', space=vmem, size = 0x12000, scoped, tag = 'internal scratch']
  %s0 = inlined_call_operand.hbm [shape: f32[2,8,32], index: 0, kind: input, shape index: {}]
  %s1 = inlined_call_operand.hbm [shape: f32[32,96], index: 1, kind: input, shape index: {}]
  %s2 = inlined_call_operand.vmem [shape: f32[1,96], index: 2, kind: input, shape index: {}]
  %s3 = inlined_call_operand.hbm [shape: f32[2,8,32], index: 3, kind: output, shape index: {}]
  %s4 = sld [smem:[#allocation0]]
  $region53: #{tpu_custom_call.1} parent=0
    _
  %s6 = ssub.s32 1, %s4
  %s7 = scalar_select 0, %s6, %s4
  $region1: #{tpu_custom_call.1} parent=0
    #allocation2 [shape = 'u8[8192]{0}', space=vmem, size = 0x2000, scoped, tag = 'input window, operand 0']
    #allocation3 [shape = 's32[2]{0}', space=sflag, size = 0x8, scoped, tag = 'scoped memory for tpu_custom_call.1']
    #allocation4 [shape = 's32[2]{0}', space=sflag, size = 0x8, scoped, tag = 'scoped memory for tpu_custom_call.1']
    #allocation5 [shape = 'u8[16384]{0}', space=vmem, size = 0x4000, scoped, tag = 'input window, operand 1, single buffered']
    #allocation6 [shape = 's32[1]{0}', space=sflag, size = 0x4, scoped, tag = 'scoped memory for tpu_custom_call.1']
    #allocation7 [shape = 'u8[8192]{0}', space=vmem, size = 0x2000, scoped, tag = 'output window, operand 0']
    %8 = vsyncpa [#allocation3], 0
    %s9 = scalar_lea.sflag [#allocation3], 1
    %10 = vsyncpa %s9, 0
    %11 = vsyncpa [#allocation6], 0
    %12 = vsyncpa [#allocation4], 0
    %s13 = scalar_lea.sflag [#allocation4], 1
    %14 = vsyncpa %s13, 0
    loop: start=0, step=1, limit=4
    $region2: #{tpu_custom_call.1} parent=1 // loop_pre_header
      _
    $region3: #{tpu_custom_call.1} parent=1 // loop_header
      %s16 = sphi 0, %s20
      %p17 = scmp.ge.s32.totalorder %s16, 4
      %s26 = sphi 0, %s28
      %s29 = sphi 0, %s26
      %s30 = sphi 0, %s29
      %s46 = sphi 0, %s30
      %s50 = sphi 0, %s50
      %s52 = sphi 0, %s50
      %s53 = sphi 0, %s52
      %s67 = sphi 0, %s53
      %s71 = sphi 0, %s71
      %s73 = sphi 0, %s71
      %s74 = sphi 0, %s73
      %s88 = sphi 0, %s74
      %s94 = sphi 0, %s96
      %s97 = sphi 0, %s94
      %s98 = sphi 0, %s97
      %s114 = sphi 0, %s98
    $region4: #{tpu_custom_call.1} parent=1 // loop_header_branch
      %19 = sbr.rel (%p17) target = $region8
    $region5: #{tpu_custom_call.1} parent=1 // loop_body
      %s21 = ssub.s32 %s16, 1
      %s22 = ssub.s32 %s16, 2
      %s23 = sadd.s32 %s16, 1
      %s24 = ssub.s32 %s16, %s23
      %p25 = scmp.eq.s32.totalorder %s24, 0
      %s27 = sadd.s32 %s26, 1
      %s28 = scalar_select %p25, %s26, %s27
      %p31 = pneg %p25
      %p32 = scmp.eq.s32.totalorder %s16, 1
      %p33 = por %p31, %p32
      %p34 = scmp.ne.s32.totalorder %s26, %s29
      %p35 = scmp.eq.s32.totalorder %s16, 0
      %p36 = por %p34, %p35
      %p37 = scmp.ne.s32.totalorder %s26, %s29
      %p38 = scmp.eq.s32.totalorder %s21, 1
      %p39 = por %p37, %p38
      %p40 = scmp.ne.s32.totalorder %s29, %s30
      %p41 = scmp.eq.s32.totalorder %s21, 0
      %p42 = por %p40, %p41
      %p43 = scmp.ne.s32.totalorder %s29, %s30
      %p44 = scmp.eq.s32.totalorder %s22, 1
      %p45 = por %p43, %p44
      %p47 = scmp.ne.s32.totalorder %s30, %s46
      %p48 = scmp.eq.s32.totalorder %s22, 0
      %p49 = por %p47, %p48
      %s51 = sadd.s32 %s50, 1
      %p54 = scmp.eq.s32.totalorder %s16, 1
      %p55 = scmp.ne.s32.totalorder %s50, %s52
      %p56 = scmp.eq.s32.totalorder %s16, 0
      %p57 = por %p55, %p56
      %p58 = scmp.ne.s32.totalorder %s50, %s52
      %p59 = scmp.eq.s32.totalorder %s21, 1
      %p60 = por %p58, %p59
      %p61 = scmp.ne.s32.totalorder %s52, %s53
      %p62 = scmp.eq.s32.totalorder %s21, 0
      %p63 = por %p61, %p62
      %p64 = scmp.ne.s32.totalorder %s52, %s53
      %p65 = scmp.eq.s32.totalorder %s22, 1
      %p66 = por %p64, %p65
      %p68 = scmp.ne.s32.totalorder %s53, %s67
      %p69 = scmp.eq.s32.totalorder %s22, 0
      %p70 = por %p68, %p69
      %s72 = sadd.s32 %s71, 1
      %p75 = scmp.eq.s32.totalorder %s16, 1
      %p76 = scmp.ne.s32.totalorder %s71, %s73
      %p77 = scmp.eq.s32.totalorder %s16, 0
      %p78 = por %p76, %p77
      %p79 = scmp.ne.s32.totalorder %s71, %s73
      %p80 = scmp.eq.s32.totalorder %s21, 1
      %p81 = por %p79, %p80
      %p82 = scmp.ne.s32.totalorder %s73, %s74
      %p83 = scmp.eq.s32.totalorder %s21, 0
      %p84 = por %p82, %p83
      %p85 = scmp.ne.s32.totalorder %s73, %s74
      %p86 = scmp.eq.s32.totalorder %s22, 1
      %p87 = por %p85, %p86
      %p89 = scmp.ne.s32.totalorder %s74, %s88
      %p90 = scmp.eq.s32.totalorder %s22, 0
      %p91 = por %p89, %p90
      %s92 = ssub.s32 %s16, %s23
      %p93 = scmp.eq.s32.totalorder %s92, 0
      %s95 = sadd.s32 %s94, 1
      %s96 = scalar_select %p93, %s94, %s95
      %p99 = pneg %p93
      %p100 = scmp.eq.s32.totalorder %s16, 1
      %p101 = por %p99, %p100
      %p102 = scmp.ne.s32.totalorder %s94, %s97
      %p103 = scmp.eq.s32.totalorder %s16, 0
      %p104 = por %p102, %p103
      %p105 = scmp.ne.s32.totalorder %s94, %s97
      %p106 = scmp.eq.s32.totalorder %s21, 1
      %p107 = por %p105, %p106
      %p108 = scmp.ne.s32.totalorder %s97, %s98
      %p109 = scmp.eq.s32.totalorder %s21, 0
      %p110 = por %p108, %p109
      %p111 = scmp.ne.s32.totalorder %s97, %s98
      %p112 = scmp.eq.s32.totalorder %s22, 1
      %p113 = por %p111, %p112
      %p115 = scmp.ne.s32.totalorder %s98, %s114
      %p116 = scmp.eq.s32.totalorder %s22, 0
      %p117 = por %p115, %p116
      %p118 = scmp.le.s32.totalorder 1, %s16
      %p119 = scmp.lt.s32.totalorder %s16, 3
      %p120 = pnand %p118, %p119
      %p121 = pneg %p120
      // Predicated region
      $region9: #{tpu_custom_call.1} parent=5 // pred_check
        _
      $region10: #{tpu_custom_call.1} parent=5 // pred_check_branch
        %123 = sbr.rel (%p120) target = $region12
      $region11: #{tpu_custom_call.1} parent=5 // pred_region
        %s124 = ssub.s32 %s16, 1
        // Predicated region
        $region13: #{tpu_custom_call.1} parent=11 // pred_check
          %p125 = pneg %p63
        $region14: #{tpu_custom_call.1} parent=11 // pred_check_branch
          %127 = sbr.rel (%p125) target = $region16
        $region15: #{tpu_custom_call.1} parent=11 // pred_region
          %s129 = ssub.s32 512, 512
          %130 = vsyncadd [#allocation6], %s129
          %s131 = sshll.u32 [#allocation5], 4
          %s132 = int_to_ptr.vmem [resolvable:$true] %s131
          %137 = dma.hbm_to_vmem [thread:$0]  %s1, 512, %s132, [#allocation6], 128, 128, 8
        $region16: #{tpu_custom_call.1} parent=11 // pred_fallthru
          _
        // Predicated region
        $region17: #{tpu_custom_call.1} parent=11 // pred_check
          %p138 = pneg %p84
        $region18: #{tpu_custom_call.1} parent=11 // pred_check_branch
          %140 = sbr.rel (%p138) target = $region20
        $region19: #{tpu_custom_call.1} parent=11 // pred_region
          _
        $region20: #{tpu_custom_call.1} parent=11 // pred_fallthru
          _
      $region12: #{tpu_custom_call.1} parent=5 // pred_fallthru
        _
      %p141 = scmp.lt.s32.totalorder %s16, 2
      // Predicated region
      $region21: #{tpu_custom_call.1} parent=5 // pred_check
        %p142 = pneg %p141
      $region22: #{tpu_custom_call.1} parent=5 // pred_check_branch
        %144 = sbr.rel (%p142) target = $region24
      $region23: #{tpu_custom_call.1} parent=5 // pred_region
        // Predicated region
        $region25: #{tpu_custom_call.1} parent=23 // pred_check
          %p145 = pneg %p36
        $region26: #{tpu_custom_call.1} parent=23 // pred_check_branch
          %147 = sbr.rel (%p145) target = $region28
        $region27: #{tpu_custom_call.1} parent=23 // pred_region
          %s148 = sand.u32 %s26, 1
          %s149 = scalar_lea.sflag [#allocation3], %s148
          %s150 = sand.u32 %s26, 1
          %s151 = smul.addr %s150, 8
          %s152 = scalar_lea.vmem [#allocation2], %s151
          %s154 = ssub.s32 128, 128
          %155 = vsyncadd %s149, %s154
          %s156 = smul.addr %s16, 128
          %s157 = scalar_lea.hbm %s0, %s156
          %s159 = sshll.u32 %s152, 4
          %s160 = int_to_ptr.vmem [resolvable:$true] %s159
          %162 = dma.hbm_to_vmem [thread:$0]  %s157, 128, %s160, %s149
        $region28: #{tpu_custom_call.1} parent=23 // pred_fallthru
          _
      $region24: #{tpu_custom_call.1} parent=5 // pred_fallthru
        _
      %p163 = scmp.le.s32.totalorder 1, %s16
      %p164 = scmp.lt.s32.totalorder %s16, 3
      %p165 = pnand %p163, %p164
      %p166 = pneg %p165
      // Predicated region
      $region29: #{tpu_custom_call.1} parent=5 // pred_check
        _
      $region30: #{tpu_custom_call.1} parent=5 // pred_check_branch
        %168 = sbr.rel (%p165) target = $region32
      $region31: #{tpu_custom_call.1} parent=5 // pred_region
        %s169 = ssub.s32 %s16, 1
        %s170 = sand.u32 %s29, 1
        %s171 = scalar_lea.sflag [#allocation3], %s170
        %s172 = sand.u32 %s29, 1
        %s173 = smul.addr %s172, 8
        %s174 = scalar_lea.vmem [#allocation2], %s173
        // Predicated region
        $region33: #{tpu_custom_call.1} parent=31 // pred_check
          %p175 = pneg %p42
        $region34: #{tpu_custom_call.1} parent=31 // pred_check_branch
          %177 = sbr.rel (%p175) target = $region36
        $region35: #{tpu_custom_call.1} parent=31 // pred_region
          %178 = dma.done %s171, 128
        $region36: #{tpu_custom_call.1} parent=31 // pred_fallthru
          _
        // Predicated region
        $region37: #{tpu_custom_call.1} parent=31 // pred_check
          %p179 = pneg %p63
        $region38: #{tpu_custom_call.1} parent=31 // pred_check_branch
          %181 = sbr.rel (%p179) target = $region40
        $region39: #{tpu_custom_call.1} parent=31 // pred_region
          %182 = dma.done [#allocation6], 512
        $region40: #{tpu_custom_call.1} parent=31 // pred_fallthru
          _
        %s183 = sand.u32 %s29, 1
        %s184 = scalar_lea.sflag [#allocation3], %s183
        %s185 = sand.u32 %s29, 1
        %s186 = smul.addr %s185, 8
        %s187 = scalar_lea.vmem [#allocation2], %s186
        %p188 = pneg %p42
        %p189 = pneg %p39
        %p190 = pneg %p63
        %p191 = pneg %p60
        %p192 = pneg %p84
        %p193 = pneg %p81
        %p194 = pneg %p110
        %p195 = pneg %p107
        %s196 = sand.u32 %s97, 1
        %s197 = scalar_lea.sflag [#allocation4], %s196
        %s198 = sand.u32 %s97, 1
        %s199 = smul.addr %s198, 8
        %s200 = scalar_lea.vmem [#allocation7], %s199
        %v202 = vld [vmem:[%s174] sm:$0xff]
        %v203 = vpack.c.bf16 %v202, %v202
        %v204 = vld [vmem:[#allocation5] sm:$0xff]
        %v205 = vld [vmem:[#allocation5 + $0x8] sm:$0xff]
        %v206 = vld [vmem:[#allocation5 + $0x10] sm:$0xff]
        %v207 = vld [vmem:[#allocation5 + $0x18] sm:$0xff]
        %v208 = vpack.c.bf16 %v205, %v204
        %v209 = vpack.c.bf16 %v207, %v206
        %v210 = vld [vmem:[%s2] sm:$0x1]
        %v212 = vlaneseq
        %v213 = vshrl.u32 %v212, 7
        %v214 = vsub.s32 0, %v213
        %v215 = vrot.slane %v210, %v214
        %vm217 = vcmask 261120
        %v219 = vsel %vm217, %v203, 0
        %221 = vmatprep.subr.bf16.mxu0 0
        %222 = vmatpush1.bf16.msra.mxu0 %v208
        %223 = vmatprep.subr.bf16.mxu0 0
        %224 = vmatpush1.bf16.msra.mxu0 %v209
        %225 = vmatprep.subr.bf16.mxu0 0
        %226 = vmatpush1.bf16.msra.mxu0 0
        %227 = vmatprep.subr.bf16.mxu0 0
        %228 = vmatpush1.bf16.msra.mxu0 0
        %229 = vmatprep.subr.bf16.mxu0 0
        %230 = vmatpush1.bf16.msra.mxu0 0
        %231 = vmatprep.subr.bf16.mxu0 0
        %232 = vmatpush1.bf16.msra.mxu0 0
        %233 = vmatprep.subr.bf16.mxu0 0
        %234 = vmatpush1.bf16.msra.mxu0 0
        %235 = vmatprep.subr.bf16.mxu0 0
        %236 = vmatpush1.bf16.msra.mxu0 0
        %237 = vmatprep.subr.bf16.mxu0 0
        %238 = vmatpush1.bf16.msra.mxu0 0
        %239 = vmatprep.subr.bf16.mxu0 0
        %240 = vmatpush1.bf16.msra.mxu0 0
        %241 = vmatprep.subr.bf16.mxu0 0
        %242 = vmatpush1.bf16.msra.mxu0 0
        %243 = vmatprep.subr.bf16.mxu0 0
        %244 = vmatpush1.bf16.msra.mxu0 0
        %245 = vmatprep.subr.bf16.mxu0 0
        %246 = vmatpush1.bf16.msra.mxu0 0
        %247 = vmatprep.subr.bf16.mxu0 0
        %248 = vmatpush1.bf16.msra.mxu0 0
        %249 = vmatprep.subr.bf16.mxu0 0
        %250 = vmatpush1.bf16.msra.mxu0 0
        %251 = vmatprep.subr.bf16.mxu0 0
        %252 = vmatpush1.bf16.msra.mxu0 0
        %253 = vmatprep.mubr.bf16.mxu0 0
        %254 = vmatmul.mubr.bf16.gmra.mrb[0].mxu0 %v219
        %v255 = vpop.f32.mrb[0].mxu0
        %v256 = vadd.f32 %v215, %v255
        %v257 = vpop.f32.mrb[0].mxu0
        %v258 = vpop.f32.mrb[0].mxu0
        %v259 = vpop.f32.mrb[0].mxu0
        %260 = vdwg.mxu0
        %v261 = vmul.f32 %v256, 0.35355338
        %v262 = vlaneseq
        %v263 = vshrl.u32 %v262, 7
        %v264 = vlaneseq
        %v265 = vand.u32 %v264, 127
        %vm266 = vcmp.le.s32.totalorder %v265, %v263
        %v267 = vpack.c.bf16 %v261, %v261
        %v268 = vpack.c.bf16 %v256, %v256
        %270 = vrot.lane.b32.xlu0 %v268, 96
        %v271 = vpop.permute.xlu0 %270
        %vm272 = vcmask 64512
        %v274 = vsel %vm272, %v267, 0
        %v277 = vsel %vm272, %v271, 0
        %279 = vmatprep.subr.bf16.mxu0 0
        %280 = vmatpush1.bf16.xpose.msra.mxu0 %v277
        %281 = vmatprep.subr.bf16.mxu0 0
        %282 = vmatpush1.bf16.xpose.msra.mxu0 0
        %283 = vmatprep.subr.bf16.mxu0 0
        %284 = vmatpush1.bf16.xpose.msra.mxu0 0
        %285 = vmatprep.subr.bf16.mxu0 0
        %286 = vmatpush1.bf16.xpose.msra.mxu0 0
        %287 = vmatprep.subr.bf16.mxu0 0
        %288 = vmatpush1.bf16.xpose.msra.mxu0 0
        %289 = vmatprep.subr.bf16.mxu0 0
        %290 = vmatpush1.bf16.xpose.msra.mxu0 0
        %291 = vmatprep.subr.bf16.mxu0 0
        %292 = vmatpush1.bf16.xpose.msra.mxu0 0
        %293 = vmatprep.subr.bf16.mxu0 0
        %294 = vmatpush1.bf16.xpose.msra.mxu0 0
        %295 = vmatprep.subr.bf16.mxu0 0
        %296 = vmatpush1.bf16.xpose.msra.mxu0 0
        %297 = vmatprep.subr.bf16.mxu0 0
        %298 = vmatpush1.bf16.xpose.msra.mxu0 0
        %299 = vmatprep.subr.bf16.mxu0 0
        %300 = vmatpush1.bf16.xpose.msra.mxu0 0
        %301 = vmatprep.subr.bf16.mxu0 0
        %302 = vmatpush1.bf16.xpose.msra.mxu0 0
        %303 = vmatprep.subr.bf16.mxu0 0
        %304 = vmatpush1.bf16.xpose.msra.mxu0 0
        %305 = vmatprep.subr.bf16.mxu0 0
        %306 = vmatpush1.bf16.xpose.msra.mxu0 0
        %307 = vmatprep.subr.bf16.mxu0 0
        %308 = vmatpush1.bf16.xpose.msra.mxu0 0
        %309 = vmatprep.subr.bf16.mxu0 0
        %310 = vmatpush1.bf16.xpose.msra.mxu0 0
        %311 = vmatprep.mubr.bf16.mxu0 0
        %312 = vmatmul.mubr.bf16.gmra.mrb[0].mxu0 %v274
        %v313 = vpop.f32.mrb[0].mxu0
        %v314 = vadd.f32 0.0, %v313
        %v315 = vpop.f32.mrb[0].mxu0
        %v316 = vpop.f32.mrb[0].mxu0
        %v317 = vpop.f32.mrb[0].mxu0
        %318 = vdwg.mxu0
        %v319 = vsel %vm266, %v314, -1e+30
        %v320 = vsel %vm272, %v319, -inf
        %321 = vmax.xlane.f32.xlu0 %v320
        %v322 = vpop.xlane.xlu0 %321
        %v323 = vsub.f32 %v319, %v322
        %v324 = vmul.f32 %v323, 1.442695
        %v325 = vpow.pop %v324
        %v326 = vsel %vm272, %v325, 0.0
        %327 = vadd.xlane.f32.xlu0 %v326
        %v328 = vpop.xlane.xlu0 %327
        %v329 = vrcp.pop %v328
        %v330 = vmul.f32 %v328, %v329
        %v331 = vsub.f32 2.0, %v330
        %v332 = vmul.f32 %v329, %v331
        %v333 = vmul.f32 %v325, %v332
        %v334 = vpack.c.bf16 %v333, %v333
        %335 = vrot.lane.b32.xlu0 %v268, 64
        %v336 = vpop.permute.xlu0 %335
        %v338 = vsel %vm272, %v334, 0
        %vm340 = vcmask 1043456
        %v342 = vsel %vm340, %v336, 0
        %344 = vmatprep.subr.bf16.mxu0 0
        %345 = vmatpush1.bf16.msra.mxu0 %v342
        %346 = vmatprep.subr.bf16.mxu0 0
        %347 = vmatpush1.bf16.msra.mxu0 0
        %348 = vmatprep.subr.bf16.mxu0 0
        %349 = vmatpush1.bf16.msra.mxu0 0
        %350 = vmatprep.subr.bf16.mxu0 0
        %351 = vmatpush1.bf16.msra.mxu0 0
        %352 = vmatprep.subr.bf16.mxu0 0
        %353 = vmatpush1.bf16.msra.mxu0 0
        %354 = vmatprep.subr.bf16.mxu0 0
        %355 = vmatpush1.bf16.msra.mxu0 0
        %356 = vmatprep.subr.bf16.mxu0 0
        %357 = vmatpush1.bf16.msra.mxu0 0
        %358 = vmatprep.subr.bf16.mxu0 0
        %359 = vmatpush1.bf16.msra.mxu0 0
        %360 = vmatprep.subr.bf16.mxu0 0
        %361 = vmatpush1.bf16.msra.mxu0 0
        %362 = vmatprep.subr.bf16.mxu0 0
        %363 = vmatpush1.bf16.msra.mxu0 0
        %364 = vmatprep.subr.bf16.mxu0 0
        %365 = vmatpush1.bf16.msra.mxu0 0
        %366 = vmatprep.subr.bf16.mxu0 0
        %367 = vmatpush1.bf16.msra.mxu0 0
        %368 = vmatprep.subr.bf16.mxu0 0
        %369 = vmatpush1.bf16.msra.mxu0 0
        %370 = vmatprep.subr.bf16.mxu0 0
        %371 = vmatpush1.bf16.msra.mxu0 0
        %372 = vmatprep.subr.bf16.mxu0 0
        %373 = vmatpush1.bf16.msra.mxu0 0
        %374 = vmatprep.subr.bf16.mxu0 0
        %375 = vmatpush1.bf16.msra.mxu0 0
        %376 = vmatprep.mubr.bf16.mxu0 0
        %377 = vmatmul.mubr.bf16.gmra.mrb[0].mxu0 %v338
        %v378 = vpop.f32.mrb[0].mxu0
        %v379 = vadd.f32 0.0, %v378
        %v380 = vpop.f32.mrb[0].mxu0
        %v381 = vpop.f32.mrb[0].mxu0
        %v382 = vpop.f32.mrb[0].mxu0
        %383 = vdwg.mxu0
        %385 = vrot.lane.b32.xlu0 %v267, 120
        %v386 = vpop.permute.xlu0 %385
        %387 = vrot.lane.b32.xlu0 %v268, 88
        %v388 = vpop.permute.xlu0 %387
        %v390 = vsel %vm272, %v386, 0
        %v393 = vsel %vm272, %v388, 0
        %395 = vmatprep.subr.bf16.mxu0 0
        %396 = vmatpush1.bf16.xpose.msra.mxu0 %v393
        %397 = vmatprep.subr.bf16.mxu0 0
        %398 = vmatpush1.bf16.xpose.msra.mxu0 0
        %399 = vmatprep.subr.bf16.mxu0 0
        %400 = vmatpush1.bf16.xpose.msra.mxu0 0
        %401 = vmatprep.subr.bf16.mxu0 0
        %402 = vmatpush1.bf16.xpose.msra.mxu0 0
        %403 = vmatprep.subr.bf16.mxu0 0
        %404 = vmatpush1.bf16.xpose.msra.mxu0 0
        %405 = vmatprep.subr.bf16.mxu0 0
        %406 = vmatpush1.bf16.xpose.msra.mxu0 0
        %407 = vmatprep.subr.bf16.mxu0 0
        %408 = vmatpush1.bf16.xpose.msra.mxu0 0
        %409 = vmatprep.subr.bf16.mxu0 0
        %410 = vmatpush1.bf16.xpose.msra.mxu0 0
        %411 = vmatprep.subr.bf16.mxu0 0
        %412 = vmatpush1.bf16.xpose.msra.mxu0 0
        %413 = vmatprep.subr.bf16.mxu0 0
        %414 = vmatpush1.bf16.xpose.msra.mxu0 0
        %415 = vmatprep.subr.bf16.mxu0 0
        %416 = vmatpush1.bf16.xpose.msra.mxu0 0
        %417 = vmatprep.subr.bf16.mxu0 0
        %418 = vmatpush1.bf16.xpose.msra.mxu0 0
        %419 = vmatprep.subr.bf16.mxu0 0
        %420 = vmatpush1.bf16.xpose.msra.mxu0 0
        %421 = vmatprep.subr.bf16.mxu0 0
        %422 = vmatpush1.bf16.xpose.msra.mxu0 0
        %423 = vmatprep.subr.bf16.mxu0 0
        %424 = vmatpush1.bf16.xpose.msra.mxu0 0
        %425 = vmatprep.subr.bf16.mxu0 0
        %426 = vmatpush1.bf16.xpose.msra.mxu0 0
        %427 = vmatprep.mubr.bf16.mxu0 0
        %428 = vmatmul.mubr.bf16.gmra.mrb[0].mxu0 %v390
        %v429 = vpop.f32.mrb[0].mxu0
        %v430 = vadd.f32 0.0, %v429
        %v431 = vpop.f32.mrb[0].mxu0
        %v432 = vpop.f32.mrb[0].mxu0
        %v433 = vpop.f32.mrb[0].mxu0
        %434 = vdwg.mxu0
        %v435 = vsel %vm266, %v430, -1e+30
        %v436 = vsel %vm272, %v435, -inf
        %437 = vmax.xlane.f32.xlu0 %v436
        %v438 = vpop.xlane.xlu0 %437
        %v439 = vsub.f32 %v435, %v438
        %v440 = vmul.f32 %v439, 1.442695
        %v441 = vpow.pop %v440
        %v442 = vsel %vm272, %v441, 0.0
        %443 = vadd.xlane.f32.xlu0 %v442
        %v444 = vpop.xlane.xlu0 %443
        %v445 = vrcp.pop %v444
        %v446 = vmul.f32 %v444, %v445
        %v447 = vsub.f32 2.0, %v446
        %v448 = vmul.f32 %v445, %v447
        %v449 = vmul.f32 %v441, %v448
        %v450 = vpack.c.bf16 %v449, %v449
        %451 = vrot.lane.b32.xlu0 %v268, 56
        %v452 = vpop.permute.xlu0 %451
        %v454 = vsel %vm272, %v450, 0
        %v457 = vsel %vm340, %v452, 0
        %459 = vmatprep.subr.bf16.mxu0 0
        %460 = vmatpush1.bf16.msra.mxu0 %v457
        %461 = vmatprep.subr.bf16.mxu0 0
        %462 = vmatpush1.bf16.msra.mxu0 0
        %463 = vmatprep.subr.bf16.mxu0 0
        %464 = vmatpush1.bf16.msra.mxu0 0
        %465 = vmatprep.subr.bf16.mxu0 0
        %466 = vmatpush1.bf16.msra.mxu0 0
        %467 = vmatprep.subr.bf16.mxu0 0
        %468 = vmatpush1.bf16.msra.mxu0 0
        %469 = vmatprep.subr.bf16.mxu0 0
        %470 = vmatpush1.bf16.msra.mxu0 0
        %471 = vmatprep.subr.bf16.mxu0 0
        %472 = vmatpush1.bf16.msra.mxu0 0
        %473 = vmatprep.subr.bf16.mxu0 0
        %474 = vmatpush1.bf16.msra.mxu0 0
        %475 = vmatprep.subr.bf16.mxu0 0
        %476 = vmatpush1.bf16.msra.mxu0 0
        %477 = vmatprep.subr.bf16.mxu0 0
        %478 = vmatpush1.bf16.msra.mxu0 0
        %479 = vmatprep.subr.bf16.mxu0 0
        %480 = vmatpush1.bf16.msra.mxu0 0
        %481 = vmatprep.subr.bf16.mxu0 0
        %482 = vmatpush1.bf16.msra.mxu0 0
        %483 = vmatprep.subr.bf16.mxu0 0
        %484 = vmatpush1.bf16.msra.mxu0 0
        %485 = vmatprep.subr.bf16.mxu0 0
        %486 = vmatpush1.bf16.msra.mxu0 0
        %487 = vmatprep.subr.bf16.mxu0 0
        %488 = vmatpush1.bf16.msra.mxu0 0
        %489 = vmatprep.subr.bf16.mxu0 0
        %490 = vmatpush1.bf16.msra.mxu0 0
        %491 = vmatprep.mubr.bf16.mxu0 0
        %492 = vmatmul.mubr.bf16.gmra.mrb[0].mxu0 %v454
        %v493 = vpop.f32.mrb[0].mxu0
        %v494 = vadd.f32 0.0, %v493
        %v495 = vpop.f32.mrb[0].mxu0
        %v496 = vpop.f32.mrb[0].mxu0
        %v497 = vpop.f32.mrb[0].mxu0
        %498 = vdwg.mxu0
        %499 = vrot.lane.b32.xlu0 %v267, 112
        %v500 = vpop.permute.xlu0 %499
        %501 = vrot.lane.b32.xlu0 %v268, 80
        %v502 = vpop.permute.xlu0 %501
        %v504 = vsel %vm272, %v500, 0
        %v507 = vsel %vm272, %v502, 0
        %509 = vmatprep.subr.bf16.mxu0 0
        %510 = vmatpush1.bf16.xpose.msra.mxu0 %v507
        %511 = vmatprep.subr.bf16.mxu0 0
        %512 = vmatpush1.bf16.xpose.msra.mxu0 0
        %513 = vmatprep.subr.bf16.mxu0 0
        %514 = vmatpush1.bf16.xpose.msra.mxu0 0
        %515 = vmatprep.subr.bf16.mxu0 0
        %516 = vmatpush1.bf16.xpose.msra.mxu0 0
        %517 = vmatprep.subr.bf16.mxu0 0
        %518 = vmatpush1.bf16.xpose.msra.mxu0 0
        %519 = vmatprep.subr.bf16.mxu0 0
        %520 = vmatpush1.bf16.xpose.msra.mxu0 0
        %521 = vmatprep.subr.bf16.mxu0 0
        %522 = vmatpush1.bf16.xpose.msra.mxu0 0
        %523 = vmatprep.subr.bf16.mxu0 0
        %524 = vmatpush1.bf16.xpose.msra.mxu0 0
        %525 = vmatprep.subr.bf16.mxu0 0
        %526 = vmatpush1.bf16.xpose.msra.mxu0 0
        %527 = vmatprep.subr.bf16.mxu0 0
        %528 = vmatpush1.bf16.xpose.msra.mxu0 0
        %529 = vmatprep.subr.bf16.mxu0 0
        %530 = vmatpush1.bf16.xpose.msra.mxu0 0
        %531 = vmatprep.subr.bf16.mxu0 0
        %532 = vmatpush1.bf16.xpose.msra.mxu0 0
        %533 = vmatprep.subr.bf16.mxu0 0
        %534 = vmatpush1.bf16.xpose.msra.mxu0 0
        %535 = vmatprep.subr.bf16.mxu0 0
        %536 = vmatpush1.bf16.xpose.msra.mxu0 0
        %537 = vmatprep.subr.bf16.mxu0 0
        %538 = vmatpush1.bf16.xpose.msra.mxu0 0
        %539 = vmatprep.subr.bf16.mxu0 0
        %540 = vmatpush1.bf16.xpose.msra.mxu0 0
        %541 = vmatprep.mubr.bf16.mxu0 0
        %542 = vmatmul.mubr.bf16.gmra.mrb[0].mxu0 %v504
        %v543 = vpop.f32.mrb[0].mxu0
        %v544 = vadd.f32 0.0, %v543
        %v545 = vpop.f32.mrb[0].mxu0
        %v546 = vpop.f32.mrb[0].mxu0
        %v547 = vpop.f32.mrb[0].mxu0
        %548 = vdwg.mxu0
        %v549 = vsel %vm266, %v544, -1e+30
        %v550 = vsel %vm272, %v549, -inf
        %551 = vmax.xlane.f32.xlu0 %v550
        %v552 = vpop.xlane.xlu0 %551
        %v553 = vsub.f32 %v549, %v552
        %v554 = vmul.f32 %v553, 1.442695
        %v555 = vpow.pop %v554
        %v556 = vsel %vm272, %v555, 0.0
        %557 = vadd.xlane.f32.xlu0 %v556
        %v558 = vpop.xlane.xlu0 %557
        %v559 = vrcp.pop %v558
        %v560 = vmul.f32 %v558, %v559
        %v561 = vsub.f32 2.0, %v560
        %v562 = vmul.f32 %v559, %v561
        %v563 = vmul.f32 %v555, %v562
        %v564 = vpack.c.bf16 %v563, %v563
        %565 = vrot.lane.b32.xlu0 %v268, 48
        %v566 = vpop.permute.xlu0 %565
        %v568 = vsel %vm272, %v564, 0
        %v571 = vsel %vm340, %v566, 0
        %573 = vmatprep.subr.bf16.mxu0 0
        %574 = vmatpush1.bf16.msra.mxu0 %v571
        %575 = vmatprep.subr.bf16.mxu0 0
        %576 = vmatpush1.bf16.msra.mxu0 0
        %577 = vmatprep.subr.bf16.mxu0 0
        %578 = vmatpush1.bf16.msra.mxu0 0
        %579 = vmatprep.subr.bf16.mxu0 0
        %580 = vmatpush1.bf16.msra.mxu0 0
        %581 = vmatprep.subr.bf16.mxu0 0
        %582 = vmatpush1.bf16.msra.mxu0 0
        %583 = vmatprep.subr.bf16.mxu0 0
        %584 = vmatpush1.bf16.msra.mxu0 0
        %585 = vmatprep.subr.bf16.mxu0 0
        %586 = vmatpush1.bf16.msra.mxu0 0
        %587 = vmatprep.subr.bf16.mxu0 0
        %588 = vmatpush1.bf16.msra.mxu0 0
        %589 = vmatprep.subr.bf16.mxu0 0
        %590 = vmatpush1.bf16.msra.mxu0 0
        %591 = vmatprep.subr.bf16.mxu0 0
        %592 = vmatpush1.bf16.msra.mxu0 0
        %593 = vmatprep.subr.bf16.mxu0 0
        %594 = vmatpush1.bf16.msra.mxu0 0
        %595 = vmatprep.subr.bf16.mxu0 0
        %596 = vmatpush1.bf16.msra.mxu0 0
        %597 = vmatprep.subr.bf16.mxu0 0
        %598 = vmatpush1.bf16.msra.mxu0 0
        %599 = vmatprep.subr.bf16.mxu0 0
        %600 = vmatpush1.bf16.msra.mxu0 0
        %601 = vmatprep.subr.bf16.mxu0 0
        %602 = vmatpush1.bf16.msra.mxu0 0
        %603 = vmatprep.subr.bf16.mxu0 0
        %604 = vmatpush1.bf16.msra.mxu0 0
        %605 = vmatprep.mubr.bf16.mxu0 0
        %606 = vmatmul.mubr.bf16.gmra.mrb[0].mxu0 %v568
        %v607 = vpop.f32.mrb[0].mxu0
        %v608 = vadd.f32 0.0, %v607
        %v609 = vpop.f32.mrb[0].mxu0
        %v610 = vpop.f32.mrb[0].mxu0
        %v611 = vpop.f32.mrb[0].mxu0
        %612 = vdwg.mxu0
        %613 = vrot.lane.b32.xlu0 %v267, 104
        %v614 = vpop.permute.xlu0 %613
        %615 = vrot.lane.b32.xlu0 %v268, 72
        %v616 = vpop.permute.xlu0 %615
        %v618 = vsel %vm272, %v614, 0
        %v621 = vsel %vm272, %v616, 0
        %623 = vmatprep.subr.bf16.mxu0 0
        %624 = vmatpush1.bf16.xpose.msra.mxu0 %v621
        %625 = vmatprep.subr.bf16.mxu0 0
        %626 = vmatpush1.bf16.xpose.msra.mxu0 0
        %627 = vmatprep.subr.bf16.mxu0 0
        %628 = vmatpush1.bf16.xpose.msra.mxu0 0
        %629 = vmatprep.subr.bf16.mxu0 0
        %630 = vmatpush1.bf16.xpose.msra.mxu0 0
        %631 = vmatprep.subr.bf16.mxu0 0
        %632 = vmatpush1.bf16.xpose.msra.mxu0 0
        %633 = vmatprep.subr.bf16.mxu0 0
        %634 = vmatpush1.bf16.xpose.msra.mxu0 0
        %635 = vmatprep.subr.bf16.mxu0 0
        %636 = vmatpush1.bf16.xpose.msra.mxu0 0
        %637 = vmatprep.subr.bf16.mxu0 0
        %638 = vmatpush1.bf16.xpose.msra.mxu0 0
        %639 = vmatprep.subr.bf16.mxu0 0
        %640 = vmatpush1.bf16.xpose.msra.mxu0 0
        %641 = vmatprep.subr.bf16.mxu0 0
        %642 = vmatpush1.bf16.xpose.msra.mxu0 0
        %643 = vmatprep.subr.bf16.mxu0 0
        %644 = vmatpush1.bf16.xpose.msra.mxu0 0
        %645 = vmatprep.subr.bf16.mxu0 0
        %646 = vmatpush1.bf16.xpose.msra.mxu0 0
        %647 = vmatprep.subr.bf16.mxu0 0
        %648 = vmatpush1.bf16.xpose.msra.mxu0 0
        %649 = vmatprep.subr.bf16.mxu0 0
        %650 = vmatpush1.bf16.xpose.msra.mxu0 0
        %651 = vmatprep.subr.bf16.mxu0 0
        %652 = vmatpush1.bf16.xpose.msra.mxu0 0
        %653 = vmatprep.subr.bf16.mxu0 0
        %654 = vmatpush1.bf16.xpose.msra.mxu0 0
        %655 = vmatprep.mubr.bf16.mxu0 0
        %656 = vmatmul.mubr.bf16.gmra.mrb[0].mxu0 %v618
        %v657 = vpop.f32.mrb[0].mxu0
        %v658 = vadd.f32 0.0, %v657
        %v659 = vpop.f32.mrb[0].mxu0
        %v660 = vpop.f32.mrb[0].mxu0
        %v661 = vpop.f32.mrb[0].mxu0
        %662 = vdwg.mxu0
        %v663 = vsel %vm266, %v658, -1e+30
        %v664 = vsel %vm272, %v663, -inf
        %665 = vmax.xlane.f32.xlu0 %v664
        %v666 = vpop.xlane.xlu0 %665
        %v667 = vsub.f32 %v663, %v666
        %v668 = vmul.f32 %v667, 1.442695
        %v669 = vpow.pop %v668
        %v670 = vsel %vm272, %v669, 0.0
        %671 = vadd.xlane.f32.xlu0 %v670
        %v672 = vpop.xlane.xlu0 %671
        %v673 = vrcp.pop %v672
        %v674 = vmul.f32 %v672, %v673
        %v675 = vsub.f32 2.0, %v674
        %v676 = vmul.f32 %v673, %v675
        %v677 = vmul.f32 %v669, %v676
        %v678 = vpack.c.bf16 %v677, %v677
        %679 = vrot.lane.b32.xlu0 %v268, 40
        %v680 = vpop.permute.xlu0 %679
        %v682 = vsel %vm272, %v678, 0
        %v685 = vsel %vm340, %v680, 0
        %687 = vmatprep.subr.bf16.mxu0 0
        %688 = vmatpush1.bf16.msra.mxu0 %v685
        %689 = vmatprep.subr.bf16.mxu0 0
        %690 = vmatpush1.bf16.msra.mxu0 0
        %691 = vmatprep.subr.bf16.mxu0 0
        %692 = vmatpush1.bf16.msra.mxu0 0
        %693 = vmatprep.subr.bf16.mxu0 0
        %694 = vmatpush1.bf16.msra.mxu0 0
        %695 = vmatprep.subr.bf16.mxu0 0
        %696 = vmatpush1.bf16.msra.mxu0 0
        %697 = vmatprep.subr.bf16.mxu0 0
        %698 = vmatpush1.bf16.msra.mxu0 0
        %699 = vmatprep.subr.bf16.mxu0 0
        %700 = vmatpush1.bf16.msra.mxu0 0
        %701 = vmatprep.subr.bf16.mxu0 0
        %702 = vmatpush1.bf16.msra.mxu0 0
        %703 = vmatprep.subr.bf16.mxu0 0
        %704 = vmatpush1.bf16.msra.mxu0 0
        %705 = vmatprep.subr.bf16.mxu0 0
        %706 = vmatpush1.bf16.msra.mxu0 0
        %707 = vmatprep.subr.bf16.mxu0 0
        %708 = vmatpush1.bf16.msra.mxu0 0
        %709 = vmatprep.subr.bf16.mxu0 0
        %710 = vmatpush1.bf16.msra.mxu0 0
        %711 = vmatprep.subr.bf16.mxu0 0
        %712 = vmatpush1.bf16.msra.mxu0 0
        %713 = vmatprep.subr.bf16.mxu0 0
        %714 = vmatpush1.bf16.msra.mxu0 0
        %715 = vmatprep.subr.bf16.mxu0 0
        %716 = vmatpush1.bf16.msra.mxu0 0
        %717 = vmatprep.subr.bf16.mxu0 0
        %718 = vmatpush1.bf16.msra.mxu0 0
        %719 = vmatprep.mubr.bf16.mxu0 0
        %720 = vmatmul.mubr.bf16.gmra.mrb[0].mxu0 %v682
        %v721 = vpop.f32.mrb[0].mxu0
        %v722 = vadd.f32 0.0, %v721
        %v723 = vpop.f32.mrb[0].mxu0
        %v724 = vpop.f32.mrb[0].mxu0
        %v725 = vpop.f32.mrb[0].mxu0
        %726 = vdwg.mxu0
        %728 = vrot.lane.b32.xlu0 %v494, 8
        %v729 = vpop.permute.xlu0 %728
        %732 = vrot.lane.b32.xlu0 %v608, 16
        %v733 = vpop.permute.xlu0 %732
        %736 = vrot.lane.b32.xlu0 %v722, 24
        %v737 = vpop.permute.xlu0 %736
        %v739 = vsel %vm272, %v379, %v729
        %vm740 = vcmask 130048
        %v741 = vsel %vm740, %v739, %v733
        %vm742 = vcmask 195584
        %v743 = vsel %vm742, %v741, %v737
        %744 = vst.msk [vmem:[%s200] sm:$0xff] %vm217, %v743
        %s745 = sand.u32 %s97, 1
        %s746 = scalar_lea.sflag [#allocation4], %s745
        %s747 = sand.u32 %s97, 1
        %s748 = smul.addr %s747, 8
        %s749 = scalar_lea.vmem [#allocation7], %s748
        // Predicated region
        $region41: #{tpu_custom_call.1} parent=31 // pred_check
          %p750 = pneg %p107
        $region42: #{tpu_custom_call.1} parent=31 // pred_check_branch
          %752 = sbr.rel (%p750) target = $region44
        $region43: #{tpu_custom_call.1} parent=31 // pred_region
          %s754 = ssub.s32 128, 128
          %755 = vsyncadd %s746, %s754
          %s756 = smul.addr %s21, 128
          %s757 = scalar_lea.hbm %s3, %s756
          %s759 = sshll.u32 %s749, 4
          %s760 = int_to_ptr.vmem [resolvable:$true] %s759
          %762 = dma.vmem_to_hbm [thread:$0]  %s760, 128, %s757, %s746
        $region44: #{tpu_custom_call.1} parent=31 // pred_fallthru
          _
      $region32: #{tpu_custom_call.1} parent=5 // pred_fallthru
        _
      %p763 = scmp.le.s32.totalorder 2, %s16
      // Predicated region
      $region45: #{tpu_custom_call.1} parent=5 // pred_check
        %p764 = pneg %p763
      $region46: #{tpu_custom_call.1} parent=5 // pred_check_branch
        %766 = sbr.rel (%p764) target = $region48
      $region47: #{tpu_custom_call.1} parent=5 // pred_region
        %s767 = ssub.s32 %s16, 2
        // Predicated region
        $region49: #{tpu_custom_call.1} parent=47 // pred_check
          %p768 = pneg %p113
        $region50: #{tpu_custom_call.1} parent=47 // pred_check_branch
          %770 = sbr.rel (%p768) target = $region52
        $region51: #{tpu_custom_call.1} parent=47 // pred_region
          %s771 = sand.u32 %s98, 1
          %s772 = scalar_lea.sflag [#allocation4], %s771
          %s773 = sand.u32 %s98, 1
          %s774 = smul.addr %s773, 8
          %s775 = scalar_lea.vmem [#allocation7], %s774
          %776 = dma.done %s772, 128
        $region52: #{tpu_custom_call.1} parent=47 // pred_fallthru
          _
      $region48: #{tpu_custom_call.1} parent=5 // pred_fallthru
        _
    $region6: #{tpu_custom_call.1} parent=1 // loop_footer
      %s20 = sadd.s32 1, %s16
    $region7: #{tpu_custom_call.1} parent=1 // loop_footer_branch
      %15 = sbr.rel target = $region3
    $region8: #{tpu_custom_call.1} parent=1 // loop_exit
      _
    %777 = vsyncpa [#allocation3], 1
    %s778 = scalar_lea.sflag [#allocation3], 1
    %779 = vsyncpa %s778, 1
    %780 = vsyncpa [#allocation6], 1
    %781 = vsyncpa [#allocation4], 1
    %s782 = scalar_lea.sflag [#allocation4], 1
    %783 = vsyncpa %s782, 1

</llo_original>
